<compile_context>
chip_gen: v7x
topology: tpu7x:2x2x1
jax: 0.10.0
libtpu: 0.0.40
codegen_flags: <defaults>
</compile_context>

<pallas_src>
import functools

import jax
import jax.numpy as jnp
from jax.experimental import pallas as pl
from jax.experimental.pallas import tpu as pltpu


def _round_up(x, m):
    return ((x + m - 1) // m) * m


def _cdiv(a, b):
    return (a + b - 1) // b


def _vmem_capacity_bytes():
    """Physical VMEM per TensorCore; conservative fallback = v7x's 64 MiB."""
    try:
        info = pltpu.get_tpu_info()
        cap = getattr(info, "vmem_capacity_bytes", None)
        if cap:
            return int(cap)
    except Exception:
        pass
    return 64 << 20


def _choose_tiles(N, C1, HW, itemsize, block_budget):
    """Return (Nt, HWt, tiled_hw) with one x block kept within block_budget bytes."""
    bytes_per_row_full_hw = C1 * HW * itemsize
    min_rows = min(N, 8)

    if min_rows * bytes_per_row_full_hw <= block_budget:
        # Small-HW path: full HW as the last block dim, no reduction grid axis,
        # no padded copies of x.
        if N <= 8:
            Nt = N
        else:
            max_rows = block_budget // bytes_per_row_full_hw          # >= 8 here
            Nt = max(8, min((max_rows // 8) * 8, _round_up(N, 8), 256))
            # Ensure >=2 (ideally >=4) batch tiles so both v7x cores get work.
            target_tiles = 4 if N >= 32 else 2
            while Nt > 8 and _cdiv(N, Nt) < target_tiles:
                new_nt = max(8, ((Nt // 2) // 8) * 8)
                if new_nt == Nt:
                    break
                Nt = new_nt
        return Nt, HW, False

    # Large-HW path: tile HW in multiples of 128 lanes; trade Nt down first so
    # HWt can stay big (bandwidth efficiency).
    Nt = N if N <= 8 else 8
    max_lanes = (block_budget // max(1, Nt * C1 * itemsize)) // 128 * 128
    HWt = int(min(_round_up(HW, 128), max(128, max_lanes), 4096))
    return Nt, HWt, True


def _classify_kernel_full_hw(x_ref, w_ref, b_ref, o_ref, *, inv_hw):
    # x_ref: (Nt, C1, HW)  w_ref: (C1, C2p)  b_ref: (1, C2p)  o_ref: (Nt, C2p)
    pooled = jnp.sum(x_ref[...], axis=-1, dtype=jnp.float32) * inv_hw       # (Nt, C1)
    out = jnp.dot(pooled, w_ref[...].astype(jnp.float32),
                  preferred_element_type=jnp.float32)                       # 1x1 conv
    o_ref[...] = (out + b_ref[...]).astype(o_ref.dtype)


def _classify_kernel_tiled_hw(x_ref, w_ref, b_ref, o_ref, acc_ref, *,
                              inv_hw, hw_total, hw_tile, n_chunks):
    # x_ref: (Nt, C1, HWt)   acc_ref: (Nt, C1, 128) f32 lane-partial sums
    k = pl.program_id(1)

    @pl.when(k == 0)
    def _():
        acc_ref[...] = jnp.zeros_like(acc_ref)

    x = x_ref[...]
    if hw_total % hw_tile != 0:
        # Mask the ragged tail of the last HW tile (OOB lanes hold garbage).
        lane = jax.lax.broadcasted_iota(jnp.int32, x.shape, dimension=2)
        x = jnp.where(lane < (hw_total - k * hw_tile), x, jnp.zeros_like(x))

    # Pure-VPU accumulation into 128-lane partials (no per-step XLU reduce).
    acc = acc_ref[...]
    for j in range(n_chunks):
        acc = acc + x[:, :, j * 128:(j + 1) * 128].astype(jnp.float32)
    acc_ref[...] = acc

    @pl.when(k == pl.num_programs(1) - 1)
    def _():
        pooled = jnp.sum(acc, axis=-1) * inv_hw                             # (Nt, C1)
        out = jnp.dot(pooled, w_ref[...].astype(jnp.float32),
                      preferred_element_type=jnp.float32)
        o_ref[...] = (out + b_ref[...]).astype(o_ref.dtype)


def classify_forward(x_nchw, weight, bias, *, block_budget_bytes=None):
    """Classify.forward for a single input tensor.

    x_nchw: (N, C1, H, W); weight: (C2, C1, 1, 1); bias: (C2,) -> (N, C2).
    """
    # TODO(synk): list-input variant (torch.cat of per-tensor pools along C) not implemented.
    N, C1, H, W = x_nchw.shape
    C2 = weight.shape[0]
    HW = H * W
    x_dtype = x_nchw.dtype
    itemsize = jnp.dtype(x_dtype).itemsize

    cap = _vmem_capacity_bytes()
    if block_budget_bytes is None:
        block_budget = max(1 << 20, min(16 << 20, cap // 8))
    else:
        block_budget = int(block_budget_bytes)

    Nt, HWt, tiled_hw = _choose_tiles(N, C1, HW, itemsize, block_budget)

    C2_pad = _round_up(C2, 128)
    inv_hw = 1.0 / float(HW)

    # Free reshape of contiguous NCHW; NO padded copies of x in HBM.
    x_flat = x_nchw.reshape(N, C1, HW)

    # 1x1 conv == dense (C1 -> C2). Weight kept in the input dtype (small
    # resident VMEM footprint); f32 accumulation inside the kernel.
    w_mat = weight.reshape(C2, C1).T.astype(x_dtype)                 # (C1, C2)
    b_row = bias.astype(jnp.float32).reshape(1, C2)
    if C2_pad != C2:
        w_mat = jnp.pad(w_mat, ((0, 0), (0, C2_pad - C2)))
        b_row = jnp.pad(b_row, ((0, 0), (0, C2_pad - C2)))

    n_i = _cdiv(N, Nt)

    x_block_bytes = Nt * C1 * HWt * itemsize
    out_block_bytes = Nt * C2_pad * itemsize
    wb_bytes = C1 * C2_pad * itemsize + C2_pad * 4

    cost = pl.CostEstimate(
        flops=2 * N * C1 * C2 + N * C1 * HW,
        transcendentals=0,
        bytes_accessed=N * C1 * HW * itemsize + wb_bytes + N * C2_pad * itemsize,
    )

    if not tiled_hw:
        grid = (n_i,)
        in_specs = [
            pl.BlockSpec((Nt, C1, HW), lambda i: (i, 0, 0)),          # streamed x
            pl.BlockSpec((C1, C2_pad), lambda i: (0, 0)),             # resident w
            pl.BlockSpec((1, C2_pad), lambda i: (0, 0)),              # resident b
        ]
        out_spec = pl.BlockSpec((Nt, C2_pad), lambda i: (i, 0))
        scratch_shapes = []
        kernel = functools.partial(_classify_kernel_full_hw, inv_hw=inv_hw)
        dim_sem = ("parallel",)
        need = 2 * (x_block_bytes + out_block_bytes + wb_bytes)
    else:
        n_k = _cdiv(HW, HWt)
        grid = (n_i, n_k)
        in_specs = [
            pl.BlockSpec((Nt, C1, HWt), lambda i, k: (i, 0, k)),
            pl.BlockSpec((C1, C2_pad), lambda i, k: (0, 0)),
            pl.BlockSpec((1, C2_pad), lambda i, k: (0, 0)),
        ]
        out_spec = pl.BlockSpec((Nt, C2_pad), lambda i, k: (i, 0))
        acc_bytes = Nt * C1 * 128 * 4
        scratch_shapes = [pltpu.VMEM((Nt, C1, 128), jnp.float32)]
        kernel = functools.partial(_classify_kernel_tiled_hw, inv_hw=inv_hw,
                                   hw_total=HW, hw_tile=HWt, n_chunks=HWt // 128)
        dim_sem = ("parallel", "arbitrary")
        need = 2 * (x_block_bytes + out_block_bytes + wb_bytes) + acc_bytes

    vmem_limit = int(min(cap, max(need + (4 << 20), 32 << 20)))

    out_padded = pl.pallas_call(
        kernel,
        out_shape=jax.ShapeDtypeStruct((N, C2_pad), x_dtype),
        grid_spec=pltpu.PrefetchScalarGridSpec(
            num_scalar_prefetch=0,
            grid=grid,
            in_specs=in_specs,
            out_specs=out_spec,
            scratch_shapes=scratch_shapes,
        ),
        compiler_params=pltpu.CompilerParams(
            dimension_semantics=dim_sem,
            vmem_limit_bytes=vmem_limit,
        ),
        cost_estimate=cost,
    )(x_flat, w_mat, b_row)

    return out_padded[:, :C2]


def _reference(x, weight, bias):
    C2, C1 = weight.shape[:2]
    pooled = jnp.mean(x, axis=(2, 3))                                # (N, C1)
    return pooled @ weight.reshape(C2, C1).T + bias[None, :]


if __name__ == "__main__":
    # Module config: c1 input channels, c2 output classes, k=1 (so padding=0)
    N, C1, H, W = 2, 4, 16, 16
    C2 = 8

    key = jax.random.PRNGKey(0)
    kx, kw, kb = jax.random.split(key, 3)

    x = jax.random.normal(kx, (N, C1, H, W), dtype=jnp.float32)
    # Conv2d(c1, c2, 1) param shapes: weight (C2, C1, 1, 1), bias (C2,)
    fan_in = C1 * 1 * 1
    bound = 1.0 / (fan_in ** 0.5)
    weight = jax.random.uniform(kw, (C2, C1, 1, 1), jnp.float32, -bound, bound)
    bias = jax.random.uniform(kb, (C2,), jnp.float32, -bound, bound)

    # Default path (full-HW block, no reduction grid axis).
    out = classify_forward(x, weight, bias)
    out = jax.block_until_ready(out)
    ref = _reference(x, weight, bias)
    assert out.shape == (N, C2)
    assert jnp.allclose(out, ref, atol=1e-4, rtol=1e-4)

    # Exercise the large-HW (tiled + masked) path by forcing a tiny block budget,
    # including a non-128-multiple HW so the in-kernel tail mask is covered.
    x2 = jax.random.normal(kx, (N, C1, 15, 15), dtype=jnp.float32)
    out2 = classify_forward(x2, weight, bias, block_budget_bytes=4096)
    out2 = jax.block_until_ready(out2)
    ref2 = _reference(x2, weight, bias)
    assert out2.shape == (N, C2)
    assert jnp.allclose(out2, ref2, atol=1e-4, rtol=1e-4)

    print("KERNEL_OK")
</pallas_src>

<mosaic_0001>
module attributes {stable_mosaic.version = 11 : i64} {
  func.func @_classify_kernel_full_hw(%arg0: i32, %arg1: memref<2x4x256xf32, #tpu.memory_space<vmem>>, %arg2: memref<4x128xf32, #tpu.memory_space<vmem>>, %arg3: memref<1x128xf32, #tpu.memory_space<vmem>>, %arg4: memref<2x128xf32, #tpu.memory_space<vmem>>) attributes {dimension_semantics = [#tpu.dimension_semantics<parallel>], iteration_bounds = array<i64: 1>, scalar_prefetch = 0 : i64, scratch_operands = 0 : i64, tpu.core_type = #tpu.core_type<tc>, window_params = [{transform_indices = @transform_0, window_bounds = array<i64: 2, 4, 256>}, {pipeline_mode = #tpu.pipeline_mode<synchronous>, transform_indices = @transform_1, window_bounds = array<i64: 4, 128>}, {pipeline_mode = #tpu.pipeline_mode<synchronous>, transform_indices = @transform_2, window_bounds = array<i64: 1, 128>}, {transform_indices = @transform_3, window_bounds = array<i64: 2, 128>}]} {
    %c0 = arith.constant 0 : index
    %c0_0 = arith.constant 0 : index
    %c0_1 = arith.constant 0 : index
    %0 = vector.load %arg1[%c0, %c0_0, %c0_1] : memref<2x4x256xf32, #tpu.memory_space<vmem>>, vector<2x4x256xf32>
    %cst = arith.constant dense<0.000000e+00> : vector<2x4xf32>
    %1 = vector.multi_reduction <add>, %0, %cst [2] : vector<2x4x256xf32> to vector<2x4xf32>
    %cst_2 = arith.constant 3.906250e-03 : f32
    %2 = vector.broadcast %cst_2 : f32 to vector<2x4xf32>
    %3 = arith.mulf %1, %2 : vector<2x4xf32>
    %c0_3 = arith.constant 0 : index
    %c0_4 = arith.constant 0 : index
    %4 = vector.load %arg2[%c0_3, %c0_4] : memref<4x128xf32, #tpu.memory_space<vmem>>, vector<4x128xf32>
    %cst_5 = arith.constant dense<0.000000e+00> : vector<2x128xf32>
    %5 = tpu.matmul %3, %4, %cst_5 {dimension_numbers = #tpu.dot_dimension_numbers<[1], [0], [0], [1], [0, 0, 1, 1], [], []>} : vector<2x4xf32>, vector<4x128xf32>, vector<2x128xf32> -> vector<2x128xf32>
    %c0_6 = arith.constant 0 : index
    %c0_7 = arith.constant 0 : index
    %6 = vector.load %arg3[%c0_6, %c0_7] : memref<1x128xf32, #tpu.memory_space<vmem>>, vector<1x128xf32>
    %7 = vector.broadcast %6 : vector<1x128xf32> to vector<2x128xf32>
    %8 = arith.addf %5, %7 : vector<2x128xf32>
    %c0_8 = arith.constant 0 : index
    %c0_9 = arith.constant 0 : index
    %9 = vector.load %arg4[%c0_8, %c0_9] : memref<2x128xf32, #tpu.memory_space<vmem>>, vector<2x128xf32>
    tpu.vector_store %arg4[%c0_8, %c0_9], %8 {strides = array<i32>} : memref<2x128xf32, #tpu.memory_space<vmem>>, vector<2x128xf32>,
    return
  }
  func.func @transform_0(%arg0: i32) -> (i32, i32, i32) {
    %c0_i32 = arith.constant 0 : i32
    %c0_i32_0 = arith.constant 0 : i32
    %c0_i32_1 = arith.constant 0 : i32
    return %arg0, %c0_i32, %c0_i32_0 : i32, i32, i32
  }
  func.func @transform_1(%arg0: i32) -> (i32, i32) {
    %c0_i32 = arith.constant 0 : i32
    %c0_i32_0 = arith.constant 0 : i32
    %c0_i32_1 = arith.constant 0 : i32
    return %c0_i32, %c0_i32_0 : i32, i32
  }
  func.func @transform_2(%arg0: i32) -> (i32, i32) {
    %c0_i32 = arith.constant 0 : i32
    %c0_i32_0 = arith.constant 0 : i32
    %c0_i32_1 = arith.constant 0 : i32
    return %c0_i32, %c0_i32_0 : i32, i32
  }
  func.func @transform_3(%arg0: i32) -> (i32, i32) {
    %c0_i32 = arith.constant 0 : i32
    %c0_i32_0 = arith.constant 0 : i32
    return %arg0, %c0_i32 : i32, i32
  }
}

</mosaic_0001>

<llo_original>
// kernel: tpu_custom_call.1
$region0: #{tpu_custom_call.1}
  #allocation0 [shape = 'u32[]', space=smem, size = 0x4, offset = 0x4, fixed_abs, tag = 'smem constant byte address 0x4 - core index']
  #allocation1 [shape = 'u32[144,128]{1,0:T(1,128)}', space=vmem, size = 0x12000, scoped, tag = 'internal scratch']
  %s0 = inlined_call_operand.hbm [shape: f32[2,4,256], index: 0, kind: input, shape index: {}]
  %s1 = inlined_call_operand.hbm [shape: f32[4,128], index: 1, kind: input, shape index: {}]
  %s2 = inlined_call_operand.vmem [shape: f32[1,128], index: 2, kind: input, shape index: {}]
  %s3 = inlined_call_operand.hbm [shape: f32[2,128], index: 3, kind: output, shape index: {}]
  %s4 = sld [smem:[#allocation0]]
  $region30: #{tpu_custom_call.1} parent=0
    _
  %s6 = ssub.s32 1, %s4
  %s7 = scalar_select 0, %s6, %s4
  $region1: #{tpu_custom_call.1} parent=0
    #allocation2 [shape = 'u8[8192]{0}', space=vmem, size = 0x2000, scoped, tag = 'input window, operand 0, single buffered']
    #allocation3 [shape = 's32[1]{0}', space=sflag, size = 0x4, scoped, tag = 'scoped memory for tpu_custom_call.1']
    #allocation4 [shape = 's32[1]{0}', space=sflag, size = 0x4, scoped, tag = 'scoped memory for tpu_custom_call.1']
    #allocation5 [shape = 'u8[2048]{0}', space=vmem, size = 0x800, scoped, tag = 'input window, operand 1, single buffered']
    #allocation6 [shape = 's32[1]{0}', space=sflag, size = 0x4, scoped, tag = 'scoped memory for tpu_custom_call.1']
    #allocation7 [shape = 'u8[1024]{0}', space=vmem, size = 0x400, scoped, tag = 'output window, operand 0, single buffered']
    %8 = vsyncpa [#allocation3], 0
    %9 = vsyncpa [#allocation6], 0
    %10 = vsyncpa [#allocation4], 0
    // Predicated region
    $region2: #{tpu_custom_call.1} parent=1 // pred_check
      _
    $region3: #{tpu_custom_call.1} parent=1 // pred_check_branch
      %12 = sbr.rel (0) target = $region5
    $region4: #{tpu_custom_call.1} parent=1 // pred_region
      %s14 = ssub.s32 256, 256
      %15 = vsyncadd [#allocation3], %s14
      %s16 = sshll.u32 [#allocation2], 4
      %s17 = int_to_ptr.vmem [resolvable:$true] %s16
      %22 = dma.hbm_to_vmem [thread:$0]  %s0, 256, %s17, [#allocation3], 128, 128, 8
    $region5: #{tpu_custom_call.1} parent=1 // pred_fallthru
      _
    // Predicated region
    $region6: #{tpu_custom_call.1} parent=1 // pred_check
      _
    $region7: #{tpu_custom_call.1} parent=1 // pred_check_branch
      %24 = sbr.rel (0) target = $region9
    $region8: #{tpu_custom_call.1} parent=1 // pred_region
      %s26 = ssub.s32 64, 64
      %27 = vsyncadd [#allocation6], %s26
      %s29 = sshll.u32 [#allocation5], 4
      %s30 = int_to_ptr.vmem [resolvable:$true] %s29
      %32 = dma.hbm_to_vmem [thread:$0]  %s1, 64, %s30, [#allocation6]
    $region9: #{tpu_custom_call.1} parent=1 // pred_fallthru
      _
    // Predicated region
    $region10: #{tpu_custom_call.1} parent=1 // pred_check
      _
    $region11: #{tpu_custom_call.1} parent=1 // pred_check_branch
      %34 = sbr.rel (0) target = $region13
    $region12: #{tpu_custom_call.1} parent=1 // pred_region
      _
    $region13: #{tpu_custom_call.1} parent=1 // pred_fallthru
      _
    // Predicated region
    $region14: #{tpu_custom_call.1} parent=1 // pred_check
      _
    $region15: #{tpu_custom_call.1} parent=1 // pred_check_branch
      %36 = sbr.rel (0) target = $region17
    $region16: #{tpu_custom_call.1} parent=1 // pred_region
      %37 = dma.done [#allocation3], 256
    $region17: #{tpu_custom_call.1} parent=1 // pred_fallthru
      _
    // Predicated region
    $region18: #{tpu_custom_call.1} parent=1 // pred_check
      _
    $region19: #{tpu_custom_call.1} parent=1 // pred_check_branch
      %39 = sbr.rel (0) target = $region21
    $region20: #{tpu_custom_call.1} parent=1 // pred_region
      %40 = dma.done [#allocation6], 64
    $region21: #{tpu_custom_call.1} parent=1 // pred_fallthru
      _
    %v41 = vld [vmem:[#allocation2] sm:$0xff]
    %v42 = vld [vmem:[#allocation2 + $0x8] sm:$0xff]
    %v45 = vcombine.high %v41, %v41
    %v46 = vcombine.high %v42, %v42
    %vm49 = vcmask 1043456
    %v50 = vsel %vm49, %v41, 0.0
    %v51 = vsel %vm49, %v45, 0.0
    %v52 = vadd.f32 %v50, %v51
    %53 = vadd.xlane.f32.xlu0 %v52
    %v54 = vpop.xlane.xlu0 %53
    %v55 = vsel %vm49, %v42, 0.0
    %v56 = vsel %vm49, %v46, 0.0
    %v57 = vadd.f32 %v55, %v56
    %58 = vadd.xlane.f32.xlu0 %v57
    %v59 = vpop.xlane.xlu0 %58
    %v60 = vmul.f32 %v54, 0.00390625
    %v61 = vmul.f32 %v59, 0.00390625
    %v62 = vld [vmem:[#allocation5] sm:$0xf]
    %v63 = vld [vmem:[%s2] sm:$0x1]
    %v65 = vlaneseq
    %v66 = vshrl.u32 %v65, 7
    %v67 = vsub.s32 0, %v66
    %v68 = vrot.slane %v63, %v67
    %v72 = vlaneseq
    %v73 = vand.u32 %v72, 127
    %v74 = vlaneseq
    %v75 = vshrl.u32 %v74, 7
    %v76 = vsub.s32 %v73, %v75
    %v77 = vrot.slane %v60, %v76
    %v78 = vlaneseq
    %v79 = vshrl.u32 %v78, 7
    %v80 = vsub.s32 %v73, %v79
    %v81 = vrot.slane %v61, %v80
    %vm82 = vcmask 1041409
    %v83 = vsel %vm82, %v81, %v77
    %vm84 = vcmask 31744
    %v85 = vsel %vm84, %v83, 0
    %v88 = vsel %vm49, %v62, 0
    %90 = vmatprep.subr.mxu0 0.0
    %91 = vmatpush1.msra.mxu0 %v88
    %92 = vmatprep.subr.mxu0 0.0
    %93 = vmatpush1.msra.mxu0 0.0
    %94 = vmatprep.subr.mxu0 0.0
    %95 = vmatpush1.msra.mxu0 0.0
    %96 = vmatprep.subr.mxu0 0.0
    %97 = vmatpush1.msra.mxu0 0.0
    %98 = vmatprep.subr.mxu0 0.0
    %99 = vmatpush1.msra.mxu0 0.0
    %100 = vmatprep.subr.mxu0 0.0
    %101 = vmatpush1.msra.mxu0 0.0
    %102 = vmatprep.subr.mxu0 0.0
    %103 = vmatpush1.msra.mxu0 0.0
    %104 = vmatprep.subr.mxu0 0.0
    %105 = vmatpush1.msra.mxu0 0.0
    %106 = vmatprep.subr.mxu0 0.0
    %107 = vmatpush1.msra.mxu0 0.0
    %108 = vmatprep.subr.mxu0 0.0
    %109 = vmatpush1.msra.mxu0 0.0
    %110 = vmatprep.subr.mxu0 0.0
    %111 = vmatpush1.msra.mxu0 0.0
    %112 = vmatprep.subr.mxu0 0.0
    %113 = vmatpush1.msra.mxu0 0.0
    %114 = vmatprep.subr.mxu0 0.0
    %115 = vmatpush1.msra.mxu0 0.0
    %116 = vmatprep.subr.mxu0 0.0
    %117 = vmatpush1.msra.mxu0 0.0
    %118 = vmatprep.subr.mxu0 0.0
    %119 = vmatpush1.msra.mxu0 0.0
    %120 = vmatprep.subr.mxu0 0.0
    %121 = vmatpush1.msra.mxu0 0.0
    %122 = vmatprep.subr.mxu0 0.0
    %123 = vmatpush1.msra.mxu0 0.0
    %124 = vmatprep.subr.mxu0 0.0
    %125 = vmatpush1.msra.mxu0 0.0
    %126 = vmatprep.subr.mxu0 0.0
    %127 = vmatpush1.msra.mxu0 0.0
    %128 = vmatprep.subr.mxu0 0.0
    %129 = vmatpush1.msra.mxu0 0.0
    %130 = vmatprep.subr.mxu0 0.0
    %131 = vmatpush1.msra.mxu0 0.0
    %132 = vmatprep.subr.mxu0 0.0
    %133 = vmatpush1.msra.mxu0 0.0
    %134 = vmatprep.subr.mxu0 0.0
    %135 = vmatpush1.msra.mxu0 0.0
    %136 = vmatprep.subr.mxu0 0.0
    %137 = vmatpush1.msra.mxu0 0.0
    %138 = vmatprep.subr.mxu0 0.0
    %139 = vmatpush1.msra.mxu0 0.0
    %140 = vmatprep.subr.mxu0 0.0
    %141 = vmatpush1.msra.mxu0 0.0
    %142 = vmatprep.subr.mxu0 0.0
    %143 = vmatpush1.msra.mxu0 0.0
    %144 = vmatprep.subr.mxu0 0.0
    %145 = vmatpush1.msra.mxu0 0.0
    %146 = vmatprep.subr.mxu0 0.0
    %147 = vmatpush1.msra.mxu0 0.0
    %148 = vmatprep.subr.mxu0 0.0
    %149 = vmatpush1.msra.mxu0 0.0
    %150 = vmatprep.subr.mxu0 0.0
    %151 = vmatpush1.msra.mxu0 0.0
    %152 = vmatprep.subr.mxu0 0.0
    %153 = vmatpush1.msra.mxu0 0.0
    %154 = vmatprep.mubr.f32.mxu0 0.0
    %155 = vmatmul.mubr.f32.gmra.mrb[0].mxu0 %v85
    %v156 = vpop.f32.mrb[0].mxu0
    %v157 = vadd.f32 %v68, %v156
    %v158 = vpop.f32.mrb[0].mxu0
    %159 = vdwg.mxu0
    %160 = vst [vmem:[#allocation7] sm:$0x3] %v157
    // Predicated region
    $region22: #{tpu_custom_call.1} parent=1 // pred_check
      _
    $region23: #{tpu_custom_call.1} parent=1 // pred_check_branch
      %162 = sbr.rel (0) target = $region25
    $region24: #{tpu_custom_call.1} parent=1 // pred_region
      %s164 = ssub.s32 32, 32
      %165 = vsyncadd [#allocation4], %s164
      %s167 = sshll.u32 [#allocation7], 4
      %s168 = int_to_ptr.vmem [resolvable:$true] %s167
      %170 = dma.vmem_to_hbm [thread:$0]  %s168, 32, %s3, [#allocation4]
    $region25: #{tpu_custom_call.1} parent=1 // pred_fallthru
      _
    // Predicated region
    $region26: #{tpu_custom_call.1} parent=1 // pred_check
      _
    $region27: #{tpu_custom_call.1} parent=1 // pred_check_branch
      %172 = sbr.rel (0) target = $region29
    $region28: #{tpu_custom_call.1} parent=1 // pred_region
      %173 = dma.done [#allocation4], 32
    $region29: #{tpu_custom_call.1} parent=1 // pred_fallthru
      _
    %174 = vsyncpa [#allocation3], 1
    %175 = vsyncpa [#allocation6], 1
    %176 = vsyncpa [#allocation4], 1

</llo_original>
